<compile_context>
chip_gen: v6e
topology: v6e:2x2x1
jax: 0.10.0
libtpu: 0.0.40
codegen_flags: <defaults>
</compile_context>

<pallas_src>
import functools

import jax
import jax.numpy as jnp
from jax import lax
from jax.experimental import pallas as pl
from jax.experimental.pallas import tpu as pltpu


# ----------------------------- helpers --------------------------------------


def _pick_row_tile(n, max_tile):
    """Largest legal row tile: full extent if small, else a multiple-of-8
    divisor of n (satisfies the (8,128) block constraint)."""
    if n <= max_tile:
        return n
    t = (max_tile // 8) * 8
    while t >= 8:
        if n % t == 0:
            return t
        t -= 8
    return n


def _pick_heads_per_group(num_heads, head_dim, target_width=256):
    """Heads per grid step.  Prefer a group lane-width that is a multiple of
    128 (vreg/MXU native) near `target_width`; otherwise fall back to all
    heads (full embed dim, always layout-legal)."""
    full = num_heads * head_dim
    if full <= target_width or full % 128:
        return num_heads
    for g in range(1, num_heads + 1):
        if num_heads % g:
            continue
        w = g * head_dim
        if w % 128 == 0 and w >= min(target_width, full):
            return g
    return num_heads


# ----------------------------- kernels --------------------------------------


def _qproj_kernel(x_ref, wq_ref, bq_ref, q_ref, *, scale):
    """q = (x @ Wq + bq) * (1/sqrt(head_dim)), one full-width GEMM per row tile."""
    acc = jnp.dot(x_ref[...], wq_ref[...], preferred_element_type=jnp.float32)
    q_ref[...] = ((acc + bq_ref[...]) * scale).astype(q_ref.dtype)


def _attention_kernel(q_ref, ctx_ref, wo_ref, bo_ref, o_ref, *,
                      heads_per_group, head_dim):
    """One (batch, row-tile, head-group) step of attention + output projection."""
    g = pl.program_id(2)

    q_grp = q_ref[...]          # (tile_q, G*hd) bf16 — scale already folded in
    ctx = ctx_ref[...]          # (Lk,    G*hd) bf16 — keys == values

    # Per in-group head attention (static unrolled loop; G is small).  The
    # score/attn matmuls are inherently head_dim-narrow; head grouping keeps
    # the blocks lane-dense and the out-projection contraction G*hd wide.
    parts = []
    for j in range(heads_per_group):
        sl = slice(j * head_dim, (j + 1) * head_dim)
        qj = q_grp[:, sl]                                    # (tile_q, hd)
        kj = ctx[:, sl]                                      # (Lk, hd)
        # scores: contract the head dim of both operands (no k transpose).
        s = lax.dot_general(qj, kj, (((1,), (1,)), ((), ())),
                            preferred_element_type=jnp.float32)   # (tile_q, Lk)
        m = jnp.max(s, axis=-1, keepdims=True)
        e = jnp.exp(s - m)
        w = e * pl.reciprocal(jnp.sum(e, axis=-1, keepdims=True),
                              approx=False)                       # exact softmax
        parts.append(jnp.dot(w.astype(kj.dtype), kj,
                             preferred_element_type=jnp.float32))  # (tile_q, hd)

    attn = parts[0] if len(parts) == 1 else jnp.concatenate(parts, axis=-1)

    # This head group's slice of the output projection; summing over the
    # head-group grid axis reproduces concat_heads(attn) @ W_out exactly.
    contrib = jnp.dot(attn.astype(wo_ref.dtype), wo_ref[...],
                      preferred_element_type=jnp.float32)          # (tile_q, E)

    @pl.when(g == 0)
    def _first_group():
        # Merge the bias into the first write — no separate init pass over the
        # resident accumulator (saves a full-width store pass, v5e-friendly).
        o_ref[...] = contrib + bo_ref[...]

    @pl.when(g != 0)
    def _accumulate():
        o_ref[...] += contrib


# ----------------------------- wrapper --------------------------------------


def efficient_attention(query, context, wq, bq, wo, bo, *, num_heads):
    """query: (B, Lq, E); context: (B, Lk, E); wq/wo: (E_in, E_out); bq/bo: (E,)."""
    B, Lq, E = query.shape
    Bc, Lk, Ec = context.shape
    assert B == Bc and E == Ec and E % num_heads == 0
    H = num_heads
    hd = E // H
    scale = 1.0 / float(hd) ** 0.5

    G = _pick_heads_per_group(H, hd)
    num_groups = H // G
    gw = G * hd

    # bf16 MXU operands; biases stay f32 (added in the f32 accumulator).
    x_bf = query.reshape(B * Lq, E).astype(jnp.bfloat16)
    ctx_bf = context.astype(jnp.bfloat16)
    wq_bf = wq.astype(jnp.bfloat16)
    wo_bf = wo.astype(jnp.bfloat16)
    bq2 = bq.reshape(1, E).astype(jnp.float32)
    bo2 = bo.reshape(1, E).astype(jnp.float32)

    # ---- Stage 1: hoisted q projection (one full-lane-width GEMM) ----------
    n = B * Lq
    tile_n = _pick_row_tile(n, 512)
    q_bf = pl.pallas_call(
        functools.partial(_qproj_kernel, scale=scale),
        out_shape=jax.ShapeDtypeStruct((n, E), jnp.bfloat16),
        grid=(n // tile_n,),
        in_specs=[
            pl.BlockSpec((tile_n, E), lambda i: (i, 0)),   # x row tile
            pl.BlockSpec((E, E), lambda i: (0, 0)),        # Wq (resident)
            pl.BlockSpec((1, E), lambda i: (0, 0)),        # bq (resident)
        ],
        out_specs=pl.BlockSpec((tile_n, E), lambda i: (i, 0)),
        compiler_params=pltpu.CompilerParams(
            dimension_semantics=("parallel",)),
    )(x_bf, wq_bf, bq2)
    q_bf = q_bf.reshape(B, Lq, E)

    # ---- Stage 2: attention + output projection ----------------------------
    tile_q = _pick_row_tile(Lq, 256)
    grid = (B, Lq // tile_q, num_groups)

    out = pl.pallas_call(
        functools.partial(_attention_kernel,
                          heads_per_group=G, head_dim=hd),
        out_shape=jax.ShapeDtypeStruct((B, Lq, E), jnp.float32),
        grid=grid,
        in_specs=[
            # per (batch, row tile, head group) q slab
            pl.BlockSpec((None, tile_q, gw), lambda b, i, g: (b, i, g)),
            # per (batch, head group) keys/values
            pl.BlockSpec((None, Lk, gw), lambda b, i, g: (b, 0, g)),
            # per head-group slice of W_out
            pl.BlockSpec((gw, E), lambda b, i, g: (g, 0)),
            # output bias (resident)
            pl.BlockSpec((1, E), lambda b, i, g: (0, 0)),
        ],
        out_specs=pl.BlockSpec((None, tile_q, E), lambda b, i, g: (b, i, 0)),
        compiler_params=pltpu.CompilerParams(
            dimension_semantics=("parallel", "parallel", "arbitrary"),
            vmem_limit_bytes=64 * 1024 * 1024),
    )(q_bf, ctx_bf, wo_bf, bo2)

    return out


# ----------------------------- reference ------------------------------------


def _reference(query, context, wq, bq, wo, bo, *, num_heads):
    """Pure-JAX f32 reference mirroring the PyTorch forward."""
    B, Lq, E = query.shape
    Lk = context.shape[1]
    hd = E // num_heads
    q = query @ wq + bq
    qh = q.reshape(B, Lq, num_heads, hd).transpose(0, 2, 1, 3)
    kh = context.reshape(B, Lk, num_heads, hd).transpose(0, 2, 1, 3)
    vh = kh
    scores = jnp.einsum("bhqd,bhkd->bhqk", qh, kh) / (hd ** 0.5)
    w = jax.nn.softmax(scores, axis=-1)
    o = jnp.einsum("bhqk,bhkd->bhqd", w, vh)
    o = o.transpose(0, 2, 1, 3).reshape(B, Lq, E)
    return o @ wo + bo


if __name__ == "__main__":
    # Small deterministic example shapes (cross-attention: Lk != Lq).
    B, Lq, Lk = 2, 8, 16
    embed_dim, num_heads = 32, 4

    key = jax.random.PRNGKey(0)
    kq, kc, kwq, kbq, kwo, kbo = jax.random.split(key, 6)

    query = jax.random.normal(kq, (B, Lq, embed_dim), dtype=jnp.float32)
    context = jax.random.normal(kc, (B, Lk, embed_dim), dtype=jnp.float32)

    # Parameters stored as (E_in, E_out) so both kernel and reference compute
    # x @ W + b (same math as nn.Linear with transposed storage).
    wq = jax.random.normal(kwq, (embed_dim, embed_dim), dtype=jnp.float32) * 0.1
    bq = jax.random.normal(kbq, (embed_dim,), dtype=jnp.float32) * 0.1
    wo = jax.random.normal(kwo, (embed_dim, embed_dim), dtype=jnp.float32) * 0.1
    bo = jax.random.normal(kbo, (embed_dim,), dtype=jnp.float32) * 0.1

    out = efficient_attention(query, context, wq, bq, wo, bo,
                              num_heads=num_heads)
    out = jax.block_until_ready(out)

    ref = _reference(query, context, wq, bq, wo, bo, num_heads=num_heads)
    assert out.shape == (B, Lq, embed_dim)
    # Tolerance covers bf16 MXU operands (f32 reference); a real bug (wrong
    # head mapping / projection) produces O(0.5) errors, far above this.
    assert jnp.allclose(out, ref, atol=5e-2, rtol=5e-2), "mismatch vs reference"

    print("KERNEL_OK")
</pallas_src>

<mosaic_0001>
module attributes {stable_mosaic.version = 11 : i64} {
  func.func @_qproj_kernel(%arg0: i32, %arg1: memref<16x32xbf16, #tpu.memory_space<vmem>>, %arg2: memref<32x32xbf16, #tpu.memory_space<vmem>>, %arg3: memref<1x32xf32, #tpu.memory_space<vmem>>, %arg4: memref<16x32xbf16, #tpu.memory_space<vmem>>) attributes {dimension_semantics = [#tpu.dimension_semantics<parallel>], iteration_bounds = array<i64: 1>, scalar_prefetch = 0 : i64, scratch_operands = 0 : i64, tpu.core_type = #tpu.core_type<tc>, window_params = [{transform_indices = @transform_0, window_bounds = array<i64: 16, 32>}, {pipeline_mode = #tpu.pipeline_mode<synchronous>, transform_indices = @transform_1, window_bounds = array<i64: 32, 32>}, {pipeline_mode = #tpu.pipeline_mode<synchronous>, transform_indices = @transform_2, window_bounds = array<i64: 1, 32>}, {transform_indices = @transform_3, window_bounds = array<i64: 16, 32>}]} {
    %c0 = arith.constant 0 : index
    %c0_0 = arith.constant 0 : index
    %0 = vector.load %arg1[%c0, %c0_0] : memref<16x32xbf16, #tpu.memory_space<vmem>>, vector<16x32xbf16>
    %c0_1 = arith.constant 0 : index
    %c0_2 = arith.constant 0 : index
    %1 = vector.load %arg2[%c0_1, %c0_2] : memref<32x32xbf16, #tpu.memory_space<vmem>>, vector<32x32xbf16>
    %cst = arith.constant dense<0.000000e+00> : vector<16x32xf32>
    %2 = tpu.matmul %0, %1, %cst {dimension_numbers = #tpu.dot_dimension_numbers<[1], [0], [0], [1], [0, 0, 1, 1], [], []>} : vector<16x32xbf16>, vector<32x32xbf16>, vector<16x32xf32> -> vector<16x32xf32>
    %c0_3 = arith.constant 0 : index
    %c0_4 = arith.constant 0 : index
    %3 = vector.load %arg3[%c0_3, %c0_4] : memref<1x32xf32, #tpu.memory_space<vmem>>, vector<1x32xf32>
    %4 = vector.broadcast %3 : vector<1x32xf32> to vector<16x32xf32>
    %5 = arith.addf %2, %4 : vector<16x32xf32>
    %cst_5 = arith.constant 0.353553385 : f32
    %6 = vector.broadcast %cst_5 : f32 to vector<16x32xf32>
    %7 = arith.mulf %5, %6 : vector<16x32xf32>
    %8 = arith.truncf %7 : vector<16x32xf32> to vector<16x32xbf16>
    %c0_6 = arith.constant 0 : index
    %c0_7 = arith.constant 0 : index
    %9 = vector.load %arg4[%c0_6, %c0_7] : memref<16x32xbf16, #tpu.memory_space<vmem>>, vector<16x32xbf16>
    tpu.vector_store %arg4[%c0_6, %c0_7], %8 {strides = array<i32>} : memref<16x32xbf16, #tpu.memory_space<vmem>>, vector<16x32xbf16>,
    return
  }
  func.func @transform_0(%arg0: i32) -> (i32, i32) {
    %c0_i32 = arith.constant 0 : i32
    %c0_i32_0 = arith.constant 0 : i32
    return %arg0, %c0_i32 : i32, i32
  }
  func.func @transform_1(%arg0: i32) -> (i32, i32) {
    %c0_i32 = arith.constant 0 : i32
    %c0_i32_0 = arith.constant 0 : i32
    %c0_i32_1 = arith.constant 0 : i32
    return %c0_i32, %c0_i32_0 : i32, i32
  }
  func.func @transform_2(%arg0: i32) -> (i32, i32) {
    %c0_i32 = arith.constant 0 : i32
    %c0_i32_0 = arith.constant 0 : i32
    %c0_i32_1 = arith.constant 0 : i32
    return %c0_i32, %c0_i32_0 : i32, i32
  }
  func.func @transform_3(%arg0: i32) -> (i32, i32) {
    %c0_i32 = arith.constant 0 : i32
    %c0_i32_0 = arith.constant 0 : i32
    return %arg0, %c0_i32 : i32, i32
  }
}

</mosaic_0001>

<llo_original>
// kernel: tpu_custom_call.1
$region0: #{tpu_custom_call.1}
  #allocation0 [shape = 'u32[]', space=smem, size = 0x4, offset = 0x4, fixed_abs, tag = 'smem constant byte address 0x4 - core index']
  #allocation1 [shape = 'u32[144,128]{1,0:T(1,128)}', space=vmem, size = 0x12000, scoped, tag = 'internal scratch']
  %s0 = inlined_call_operand.hbm [shape: bf16[16,32], index: 0, kind: input, shape index: {}]
  %s1 = inlined_call_operand.hbm [shape: bf16[32,32], index: 1, kind: input, shape index: {}]
  %s2 = inlined_call_operand.vmem [shape: f32[1,32], index: 2, kind: input, shape index: {}]
  %s3 = inlined_call_operand.hbm [shape: bf16[16,32], index: 3, kind: output, shape index: {}]
  %s4 = sld [smem:[#allocation0]]
  $region30: #{tpu_custom_call.1} parent=0
    _
  %s6 = ssub.s32 1, %s4
  %s7 = scalar_select 0, %s6, %s4
  $region1: #{tpu_custom_call.1} parent=0
    #allocation2 [shape = 'u8[4096]{0}', space=vmem, size = 0x1000, scoped, tag = 'input window, operand 0, single buffered']
    #allocation3 [shape = 's32[1]{0}', space=sflag, size = 0x4, scoped, tag = 'scoped memory for tpu_custom_call.1']
    #allocation4 [shape = 's32[1]{0}', space=sflag, size = 0x4, scoped, tag = 'scoped memory for tpu_custom_call.1']
    #allocation5 [shape = 'u8[8192]{0}', space=vmem, size = 0x2000, scoped, tag = 'input window, operand 1, single buffered']
    #allocation6 [shape = 's32[1]{0}', space=sflag, size = 0x4, scoped, tag = 'scoped memory for tpu_custom_call.1']
    #allocation7 [shape = 'u8[4096]{0}', space=vmem, size = 0x1000, scoped, tag = 'output window, operand 0, single buffered']
    %8 = vsyncpa [#allocation3], 0
    %9 = vsyncpa [#allocation6], 0
    %10 = vsyncpa [#allocation4], 0
    // Predicated region
    $region2: #{tpu_custom_call.1} parent=1 // pred_check
      _
    $region3: #{tpu_custom_call.1} parent=1 // pred_check_branch
      %12 = sbr.rel (0) target = $region5
    $region4: #{tpu_custom_call.1} parent=1 // pred_region
      %s14 = ssub.s32 128, 128
      %15 = vsyncadd [#allocation3], %s14
      %s16 = sshll.u32 [#allocation2], 4
      %s17 = int_to_ptr.vmem [resolvable:$true] %s16
      %22 = dma.hbm_to_vmem [thread:$0]  %s0, 128, %s17, [#allocation3], 64, 64, 4
    $region5: #{tpu_custom_call.1} parent=1 // pred_fallthru
      _
    // Predicated region
    $region6: #{tpu_custom_call.1} parent=1 // pred_check
      _
    $region7: #{tpu_custom_call.1} parent=1 // pred_check_branch
      %24 = sbr.rel (0) target = $region9
    $region8: #{tpu_custom_call.1} parent=1 // pred_region
      %s26 = ssub.s32 256, 256
      %27 = vsyncadd [#allocation6], %s26
      %s28 = sshll.u32 [#allocation5], 4
      %s29 = int_to_ptr.vmem [resolvable:$true] %s28
      %34 = dma.hbm_to_vmem [thread:$0]  %s1, 256, %s29, [#allocation6], 64, 64, 4
    $region9: #{tpu_custom_call.1} parent=1 // pred_fallthru
      _
    // Predicated region
    $region10: #{tpu_custom_call.1} parent=1 // pred_check
      _
    $region11: #{tpu_custom_call.1} parent=1 // pred_check_branch
      %36 = sbr.rel (0) target = $region13
    $region12: #{tpu_custom_call.1} parent=1 // pred_region
      _
    $region13: #{tpu_custom_call.1} parent=1 // pred_fallthru
      _
    // Predicated region
    $region14: #{tpu_custom_call.1} parent=1 // pred_check
      _
    $region15: #{tpu_custom_call.1} parent=1 // pred_check_branch
      %38 = sbr.rel (0) target = $region17
    $region16: #{tpu_custom_call.1} parent=1 // pred_region
      %39 = dma.done [#allocation3], 128
    $region17: #{tpu_custom_call.1} parent=1 // pred_fallthru
      _
    // Predicated region
    $region18: #{tpu_custom_call.1} parent=1 // pred_check
      _
    $region19: #{tpu_custom_call.1} parent=1 // pred_check_branch
      %41 = sbr.rel (0) target = $region21
    $region20: #{tpu_custom_call.1} parent=1 // pred_region
      %42 = dma.done [#allocation6], 256
    $region21: #{tpu_custom_call.1} parent=1 // pred_fallthru
      _
    %v44 = vld [vmem:[#allocation2] sm:$0xf]
    %v45 = vld [vmem:[#allocation2 + $0x4] sm:$0xf]
    %v46 = vld [vmem:[#allocation5] sm:$0xf]
    %v47 = vld [vmem:[#allocation5 + $0x4] sm:$0xf]
    %v48 = vld [vmem:[#allocation5 + $0x8] sm:$0xf]
    %v49 = vld [vmem:[#allocation5 + $0xc] sm:$0xf]
    %v50 = vld [vmem:[%s2] sm:$0x1]
    %v52 = vlaneseq
    %v53 = vshrl.u32 %v52, 7
    %v54 = vsub.s32 0, %v53
    %v55 = vrot.slane %v50, %v54
    %v59 = vunpack.c.l.b16 %v44
    %v60 = vunpack.c.l.b16 %v45
    %v61 = vpack.c.b16 %v60, %v59
    %v66 = vunpack.c.l.b16 %v46
    %v67 = vunpack.c.l.b16 %v47
    %v68 = vunpack.c.l.b16 %v48
    %v69 = vunpack.c.l.b16 %v49
    %v70 = vpack.c.b16 %v67, %v66
    %v71 = vpack.c.b16 %v69, %v68
    %vm74 = vcmask 261120
    %v76 = vsel %vm74, %v61, 0
    %78 = vmatprep.subr.bf16.mxu0 0
    %79 = vmatpush1.bf16.msra.mxu0 0
    %80 = vmatprep.subr.bf16.mxu0 0
    %81 = vmatpush1.bf16.msra.mxu0 0
    %82 = vmatprep.subr.bf16.mxu0 0
    %83 = vmatpush1.bf16.msra.mxu0 0
    %84 = vmatprep.subr.bf16.mxu0 0
    %85 = vmatpush1.bf16.msra.mxu0 0
    %86 = vmatprep.subr.bf16.mxu0 0
    %87 = vmatpush1.bf16.msra.mxu0 0
    %88 = vmatprep.subr.bf16.mxu0 0
    %89 = vmatpush1.bf16.msra.mxu0 0
    %90 = vmatprep.subr.bf16.mxu0 0
    %91 = vmatpush1.bf16.msra.mxu0 %v71
    %92 = vmatprep.subr.bf16.mxu0 0
    %93 = vmatpush1.bf16.msra.mxu0 %v70
    %94 = vmatprep.subr.bf16.mxu0 0
    %95 = vmatpush2.bf16.msra.mxu0 0
    %96 = vmatprep.subr.bf16.mxu0 0
    %97 = vmatpush2.bf16.msra.mxu0 0
    %98 = vmatprep.subr.bf16.mxu0 0
    %99 = vmatpush2.bf16.msra.mxu0 0
    %100 = vmatprep.subr.bf16.mxu0 0
    %101 = vmatpush2.bf16.msra.mxu0 0
    %102 = vmatprep.subr.bf16.mxu0 0
    %103 = vmatpush2.bf16.msra.mxu0 0
    %104 = vmatprep.subr.bf16.mxu0 0
    %105 = vmatpush2.bf16.msra.mxu0 0
    %106 = vmatprep.subr.bf16.mxu0 0
    %107 = vmatpush2.bf16.msra.mxu0 0
    %108 = vmatprep.subr.bf16.mxu0 0
    %109 = vmatpush2.bf16.msra.mxu0 0
    %110 = vmatprep.mubr.bf16.mxu0 0
    %111 = vmatmul.mubr.bf16.gmra.mxu0 %v76
    %v112 = vpop.f32.mrf.mxu0
    %v113 = vadd.f32 %v55, %v112
    %v114 = vpop.f32.mrf.mxu0
    %v115 = vpop.f32.mrf.mxu0
    %v116 = vadd.f32 %v55, %v115
    %v117 = vpop.f32.mrf.mxu0
    %118 = vdwg.mxu0
    %v119 = vmul.f32 %v113, 0.35355338
    %v120 = vmul.f32 %v116, 0.35355338
    %v121 = vpack.c.bf16 %v120, %v119
    %v123 = vunpack.c.l.b16 %v121
    %v124 = vunpack.c.h.b16 %v121
    %v125 = vpack.c.b16 %v123, %v123
    %v126 = vpack.c.b16 %v124, %v124
    %vm129 = vcmask 257024
    %130 = vst.msk [vmem:[#allocation7] sm:$0xf] %vm129, %v125
    %131 = vst.msk [vmem:[#allocation7 + $0x4] sm:$0xf] %vm129, %v126
    // Predicated region
    $region22: #{tpu_custom_call.1} parent=1 // pred_check
      _
    $region23: #{tpu_custom_call.1} parent=1 // pred_check_branch
      %133 = sbr.rel (0) target = $region25
    $region24: #{tpu_custom_call.1} parent=1 // pred_region
      %s135 = ssub.s32 128, 128
      %136 = vsyncadd [#allocation4], %s135
      %s137 = sshll.u32 [#allocation7], 4
      %s138 = int_to_ptr.vmem [resolvable:$true] %s137
      %143 = dma.vmem_to_hbm [thread:$0]  %s138, 128, %s3, [#allocation4], 64, 64, 4
    $region25: #{tpu_custom_call.1} parent=1 // pred_fallthru
      _
    // Predicated region
    $region26: #{tpu_custom_call.1} parent=1 // pred_check
      _
    $region27: #{tpu_custom_call.1} parent=1 // pred_check_branch
      %145 = sbr.rel (0) target = $region29
    $region28: #{tpu_custom_call.1} parent=1 // pred_region
      %146 = dma.done [#allocation4], 128
    $region29: #{tpu_custom_call.1} parent=1 // pred_fallthru
      _
    %147 = vsyncpa [#allocation3], 1
    %148 = vsyncpa [#allocation6], 1
    %149 = vsyncpa [#allocation4], 1

</llo_original>
